<compile_context>
chip_gen: v7x
topology: tpu7x:2x2x1
jax: 0.10.0
libtpu: 0.0.40
codegen_flags: <defaults>
</compile_context>

<pallas_src>
import functools
import math

import jax
import jax.numpy as jnp
from jax import lax
from jax.experimental import pallas as pl
from jax.experimental.pallas import tpu as pltpu

_LANES = 128
_F32_TINY = 2.0 ** -126          # smallest normal f32
_ONE_MINUS_EPS = 1.0 - 2.0 ** -24  # nextafter(1, 0) in f32


# ----------------------------------------------------------------------------
# Parameter setup (glue, plain Python)
# ----------------------------------------------------------------------------
def get_beta_params_from_mode_and_spread(mode: float, spread: float):
    """Mode/spread -> (alpha, beta) with concentration kappa = 2 + 1/spread."""
    kappa = 2.0 + 1.0 / float(spread)
    alpha = float(mode) * (kappa - 2.0) + 1.0
    beta = (1.0 - float(mode)) * (kappa - 2.0) + 1.0
    return alpha, beta


def _round_up(v: int, m: int) -> int:
    return ((v + m - 1) // m) * m


def _num_tensorcores_per_chip() -> int:
    # Only v7x-class parts have 2 TensorCores per chip; fall back to 1.
    try:
        kind = jax.devices()[0].device_kind.lower()
    except Exception:  # pragma: no cover
        return 1
    return 2 if ("v7" in kind or "7x" in kind) else 1


def _build_interleave_matrix(num_channels: int) -> jnp.ndarray:
    """0/1 matrix G (128*P, 128*P): channel-blocked -> channel-interleaved.

    pdf_cat[:, q] = pdf_{q//128}(x[:, q%128]);  out[:, j] = pdf_{j%P}(x[:, j//P])
    so G[q, j] = 1 iff q == (j % P) * 128 + (j // P).
    """
    p = num_channels
    width = _LANES * p
    q = jnp.arange(width)
    j = jnp.arange(width)
    src = (j % p) * _LANES + (j // p)
    return (q[:, None] == src[None, :]).astype(jnp.float32)


# ----------------------------------------------------------------------------
# Pallas kernel: all P beta pdfs over one (TR, 128) tile of x, written
# channel-interleaved into a lane-dense (TR, 128*P) output tile.
# ----------------------------------------------------------------------------
def _beta_pdf_kernel(x_ref, g_ref, o_ref, *, am1, bm1, logb):
    num_channels = len(am1)
    x = x_ref[...].astype(jnp.float32)
    # Clamp to the open interval so endpoint / padded values stay finite
    # (alpha, beta >= 1 for this parameterization, so this matches the limits).
    x = jnp.clip(x, _F32_TINY, _ONE_MINUS_EPS)
    # Hoisted transcendentals, shared across all P channels (P+2 total / elem).
    lx = jnp.log(x)
    l1mx = jnp.log1p(-x)

    pdfs = []
    for p in range(num_channels):  # static unrolled; am1/bm1/logb are immediates
        pdfs.append(jnp.exp(am1[p] * lx + bm1[p] * l1mx - logb[p]))

    if num_channels > 1:
        pdf_cat = jnp.concatenate(pdfs, axis=-1)          # (TR, 128*P), channel-blocked
    else:
        pdf_cat = pdfs[0]

    # Channel interleave on the (otherwise idle) MXU: 0/1 permutation matmul.
    out = lax.dot_general(
        pdf_cat, g_ref[...],
        dimension_numbers=(((1,), (0,)), ((), ())),
        preferred_element_type=jnp.float32,
    )
    o_ref[...] = out.astype(o_ref.dtype)


# ----------------------------------------------------------------------------
# Wrapper
# ----------------------------------------------------------------------------
def _beta_channel_forward(x, g, *, am1, bm1, logb):
    if not jnp.issubdtype(x.dtype, jnp.floating):
        raise TypeError(f"BetaChannel expects a floating dtype, got {x.dtype}")

    orig_shape = x.shape
    orig_dtype = x.dtype
    num_channels = len(am1)
    itemsize = jnp.dtype(orig_dtype).itemsize

    xf = x.reshape(-1)
    n = xf.shape[0]
    r_rows = pl.cdiv(n, _LANES)
    n_rows_elems = r_rows * _LANES
    ragged = n != n_rows_elems
    if ragged:
        # Only for ragged sizes: pad the flat tail to the next 128 boundary
        # with a harmless in-(0,1) value.  Nicely shaped inputs skip this copy.
        xf = jnp.pad(xf, (0, n_rows_elems - n), constant_values=0.5)
    x2d = xf.reshape(r_rows, _LANES)

    # ---- tile-size / grid selection -------------------------------------
    TR_CAP = 512  # 512x128-row tiles sit on the ~85% DMA-efficiency plateau
    tr = r_rows if r_rows <= TR_CAP else TR_CAP
    num_steps = pl.cdiv(r_rows, tr)
    # Dual-TensorCore chips (v7x): aim for >= 2 grid steps per core so the
    # "parallel" axis load-balances and DMA overlaps compute on both cores.
    # Single-core chips (v5e/v6e) keep the single largest tile.
    ncores = _num_tensorcores_per_chip()
    min_steps = 2 * ncores
    if ncores > 1 and num_steps < min_steps and r_rows >= min_steps * 8:
        tr = _round_up(pl.cdiv(r_rows, min_steps), 8)
        num_steps = pl.cdiv(r_rows, tr)

    out_lanes = _LANES * num_channels
    kernel = functools.partial(_beta_pdf_kernel, am1=am1, bm1=bm1, logb=logb)

    cost = pl.CostEstimate(
        flops=n_rows_elems * (4 * num_channels + 3)
        + 2 * n_rows_elems * num_channels * out_lanes,          # interleave matmul
        transcendentals=n_rows_elems * (num_channels + 2),
        bytes_accessed=n_rows_elems * itemsize * (1 + num_channels) + g.size * 4,
    )

    out = pl.pallas_call(
        kernel,
        out_shape=jax.ShapeDtypeStruct((r_rows, out_lanes), orig_dtype),
        grid=(num_steps,),
        in_specs=[
            # x tile; TODO(synk): try pipeline_mode=pl.Buffered(3) on v7x if
            # xprof shows the DMA still exposed after the transpose removal.
            pl.BlockSpec((tr, _LANES), lambda r: (r, 0)),
            # constant permutation matrix: same block every step -> fetched once
            pl.BlockSpec((out_lanes, out_lanes), lambda r: (0, 0)),
        ],
        out_specs=pl.BlockSpec((tr, out_lanes), lambda r: (r, 0)),
        compiler_params=pltpu.CompilerParams(
            dimension_semantics=("parallel",),
            vmem_limit_bytes=32 * 1024 * 1024,
        ),
        cost_estimate=cost,
    )(x2d, g)

    # (R, 128*P) row-major is already element-major / channel-minor memory
    # order, so this reshape is free (no transpose, no extra HBM pass).
    out = out.reshape(n_rows_elems, num_channels)
    if ragged:
        out = out[:n]
    return out.reshape(*orig_shape, num_channels)


class BetaChannel:
    def __init__(self, modes, spreads):
        self.modes = list(modes)
        self.spreads = list(spreads)
        self.params = [
            get_beta_params_from_mode_and_spread(float(m), float(s))
            for m, s in zip(modes, spreads)
        ]
        # The mode/spread parameterization always yields alpha, beta >= 1, which
        # keeps every pdf finite (required by the in-kernel interleave matmul).
        for a, b in self.params:
            assert a >= 1.0 and b >= 1.0, "BetaChannel requires alpha,beta >= 1"

        am1 = tuple(a - 1.0 for a, _ in self.params)
        bm1 = tuple(b - 1.0 for _, b in self.params)
        logb = tuple(
            math.lgamma(a) + math.lgamma(b) - math.lgamma(a + b)
            for a, b in self.params
        )
        g = _build_interleave_matrix(len(self.params))
        # TODO(synk): for very large P the (128P, 128P) permutation matrix grows
        # as P^2 * 64 KiB; switch to per-channel (128, 128P) slices if needed.
        self._fwd = jax.jit(
            functools.partial(_beta_channel_forward, g=g, am1=am1, bm1=bm1, logb=logb)
        )

    def __call__(self, x):
        return self._fwd(x)


# ----------------------------------------------------------------------------
# Reference (pure JAX) for a sanity check
# ----------------------------------------------------------------------------
def _reference(x, params):
    outs = []
    for a, b in params:
        logb = math.lgamma(a) + math.lgamma(b) - math.lgamma(a + b)
        outs.append(jnp.exp((a - 1.0) * jnp.log(x) + (b - 1.0) * jnp.log1p(-x) - logb))
    return jnp.stack(outs, axis=-1)


if __name__ == "__main__":
    key = jax.random.PRNGKey(0)
    # x in the open interval (0, 1)
    x = jax.nn.sigmoid(jax.random.normal(key, (2, 4, 16, 16), dtype=jnp.float32))

    modes = [0.2, 0.5, 0.8]
    spreads = [0.1, 0.05, 0.1]
    model = BetaChannel(modes, spreads)

    y = model(x)
    y = jax.block_until_ready(y)

    assert y.shape == (2, 4, 16, 16, len(modes)), y.shape

    y_ref = _reference(x.astype(jnp.float32), model.params)
    rel_err = jnp.max(
        jnp.abs(y.astype(jnp.float32) - y_ref) / (jnp.abs(y_ref) + 1e-6)
    )
    assert float(rel_err) < 1e-2, f"max rel err {rel_err}"

    print("KERNEL_OK")
</pallas_src>

<mosaic_0001>
module attributes {stable_mosaic.version = 11 : i64} {
  func.func @_beta_pdf_kernel(%arg0: i32, %arg1: memref<16x128xf32, #tpu.memory_space<vmem>>, %arg2: memref<384x384xf32, #tpu.memory_space<vmem>>, %arg3: memref<16x384xf32, #tpu.memory_space<vmem>>) attributes {dimension_semantics = [#tpu.dimension_semantics<parallel>], iteration_bounds = array<i64: 1>, scalar_prefetch = 0 : i64, scratch_operands = 0 : i64, tpu.core_type = #tpu.core_type<tc>, window_params = [{transform_indices = @transform_0, window_bounds = array<i64: 16, 128>}, {pipeline_mode = #tpu.pipeline_mode<synchronous>, transform_indices = @transform_1, window_bounds = array<i64: 384, 384>}, {transform_indices = @transform_2, window_bounds = array<i64: 16, 384>}]} {
    %c0 = arith.constant 0 : index
    %c0_0 = arith.constant 0 : index
    %0 = vector.load %arg1[%c0, %c0_0] : memref<16x128xf32, #tpu.memory_space<vmem>>, vector<16x128xf32>
    %cst = arith.constant 1.17549435E-38 : f32
    %cst_1 = arith.constant 0.99999994 : f32
    %1 = vector.broadcast %cst : f32 to vector<16x128xf32>
    %2 = arith.maximumf %1, %0 : vector<16x128xf32>
    %3 = vector.broadcast %cst_1 : f32 to vector<16x128xf32>
    %4 = arith.minimumf %3, %2 : vector<16x128xf32>
    %5 = math.log %4 : vector<16x128xf32>
    %cst_2 = arith.constant 0.000000e+00 : f32
    %6 = vector.broadcast %cst_2 : f32 to vector<16x128xf32>
    %7 = arith.subf %6, %4 : vector<16x128xf32>
    %8 = math.log1p %7 : vector<16x128xf32>
    %cst_3 = arith.constant 2.000000e+00 : f32
    %9 = vector.broadcast %cst_3 : f32 to vector<16x128xf32>
    %10 = arith.mulf %9, %5 : vector<16x128xf32>
    %cst_4 = arith.constant 8.000000e+00 : f32
    %11 = vector.broadcast %cst_4 : f32 to vector<16x128xf32>
    %12 = arith.mulf %11, %8 : vector<16x128xf32>
    %13 = arith.addf %10, %12 : vector<16x128xf32>
    %cst_5 = arith.constant -6.2045579 : f32
    %14 = vector.broadcast %cst_5 : f32 to vector<16x128xf32>
    %15 = arith.subf %13, %14 : vector<16x128xf32>
    %16 = math.exp %15 : vector<16x128xf32>
    %cst_6 = arith.constant 1.000000e+01 : f32
    %17 = vector.broadcast %cst_6 : f32 to vector<16x128xf32>
    %18 = arith.mulf %17, %5 : vector<16x128xf32>
    %cst_7 = arith.constant 1.000000e+01 : f32
    %19 = vector.broadcast %cst_7 : f32 to vector<16x128xf32>
    %20 = arith.mulf %19, %8 : vector<16x128xf32>
    %21 = arith.addf %18, %20 : vector<16x128xf32>
    %cst_8 = arith.constant -15.1713133 : f32
    %22 = vector.broadcast %cst_8 : f32 to vector<16x128xf32>
    %23 = arith.subf %21, %22 : vector<16x128xf32>
    %24 = math.exp %23 : vector<16x128xf32>
    %cst_9 = arith.constant 8.000000e+00 : f32
    %25 = vector.broadcast %cst_9 : f32 to vector<16x128xf32>
    %26 = arith.mulf %25, %5 : vector<16x128xf32>
    %cst_10 = arith.constant 2.000000e+00 : f32
    %27 = vector.broadcast %cst_10 : f32 to vector<16x128xf32>
    %28 = arith.mulf %27, %8 : vector<16x128xf32>
    %29 = arith.addf %26, %28 : vector<16x128xf32>
    %cst_11 = arith.constant -6.2045579 : f32
    %30 = vector.broadcast %cst_11 : f32 to vector<16x128xf32>
    %31 = arith.subf %29, %30 : vector<16x128xf32>
    %32 = math.exp %31 : vector<16x128xf32>
    %33 = tpu.concatenate %16, %24, %32 in 1 : vector<16x128xf32>, vector<16x128xf32>, vector<16x128xf32> -> vector<16x384xf32>
    %c0_12 = arith.constant 0 : index
    %c0_13 = arith.constant 0 : index
    %34 = vector.load %arg2[%c0_12, %c0_13] : memref<384x384xf32, #tpu.memory_space<vmem>>, vector<384x384xf32>
    %cst_14 = arith.constant dense<0.000000e+00> : vector<16x384xf32>
    %35 = tpu.matmul %33, %34, %cst_14 {dimension_numbers = #tpu.dot_dimension_numbers<[1], [0], [0], [1], [0, 0, 1, 1], [], []>} : vector<16x384xf32>, vector<384x384xf32>, vector<16x384xf32> -> vector<16x384xf32>
    %c0_15 = arith.constant 0 : index
    %c0_16 = arith.constant 0 : index
    %36 = vector.load %arg3[%c0_15, %c0_16] : memref<16x384xf32, #tpu.memory_space<vmem>>, vector<16x384xf32>
    tpu.vector_store %arg3[%c0_15, %c0_16], %35 {strides = array<i32>} : memref<16x384xf32, #tpu.memory_space<vmem>>, vector<16x384xf32>,
    return
  }
  func.func @transform_0(%arg0: i32) -> (i32, i32) {
    %c0_i32 = arith.constant 0 : i32
    %c0_i32_0 = arith.constant 0 : i32
    return %arg0, %c0_i32 : i32, i32
  }
  func.func @transform_1(%arg0: i32) -> (i32, i32) {
    %c0_i32 = arith.constant 0 : i32
    %c0_i32_0 = arith.constant 0 : i32
    %c0_i32_1 = arith.constant 0 : i32
    return %c0_i32, %c0_i32_0 : i32, i32
  }
  func.func @transform_2(%arg0: i32) -> (i32, i32) {
    %c0_i32 = arith.constant 0 : i32
    %c0_i32_0 = arith.constant 0 : i32
    return %arg0, %c0_i32 : i32, i32
  }
}

</mosaic_0001>

<llo_original>
// kernel: _beta_channel_forward.1
$region0: #{_beta_channel_forward.1}
  #allocation0 [shape = 'u32[]', space=smem, size = 0x4, offset = 0x4, fixed_abs, tag = 'smem constant byte address 0x4 - core index']
  #allocation1 [shape = 'u32[144,128]{1,0:T(1,128)}', space=vmem, size = 0x12000, scoped, tag = 'internal scratch']
  %s0 = inlined_call_operand.vmem [shape: f32[16,128], index: 0, kind: input, shape index: {}]
  %s1 = inlined_call_operand.hbm [shape: f32[384,384], index: 1, kind: input, shape index: {}]
  %s2 = inlined_call_operand.vmem [shape: f32[16,384], index: 2, kind: output, shape index: {}]
  %s3 = sld [smem:[#allocation0]]
  $region22: #{_beta_channel_forward.1} parent=0
    _
  %s5 = ssub.s32 1, %s3
  %s6 = scalar_select 0, %s5, %s3
  $region1: #{_beta_channel_forward.1} parent=0
    #allocation2 [shape = 'u8[589824]{0}', space=vmem, size = 0x90000, scoped, tag = 'input window, operand 1, single buffered']
    #allocation3 [shape = 's32[1]{0}', space=sflag, size = 0x4, scoped, tag = 'scoped memory for _beta_channel_forward.1']
    %7 = vsyncpa [#allocation3], 0
    // Predicated region
    $region2: #{_beta_channel_forward.1} parent=1 // pred_check
      _
    $region3: #{_beta_channel_forward.1} parent=1 // pred_check_branch
      %9 = sbr.rel (0) target = $region5
    $region4: #{_beta_channel_forward.1} parent=1 // pred_region
      _
    $region5: #{_beta_channel_forward.1} parent=1 // pred_fallthru
      _
    // Predicated region
    $region6: #{_beta_channel_forward.1} parent=1 // pred_check
      _
    $region7: #{_beta_channel_forward.1} parent=1 // pred_check_branch
      %11 = sbr.rel (0) target = $region9
    $region8: #{_beta_channel_forward.1} parent=1 // pred_region
      %s13 = ssub.s32 18432, 18432
      %14 = vsyncadd [#allocation3], %s13
      %s15 = sshll.u32 [#allocation2], 4
      %s16 = int_to_ptr.vmem [resolvable:$true] %s15
      %21 = dma.hbm_to_vmem [thread:$0]  %s1, 18432, %s16, [#allocation3], 384, 384, 24
    $region9: #{_beta_channel_forward.1} parent=1 // pred_fallthru
      _
    // Predicated region
    $region10: #{_beta_channel_forward.1} parent=1 // pred_check
      _
    $region11: #{_beta_channel_forward.1} parent=1 // pred_check_branch
      %23 = sbr.rel (0) target = $region13
    $region12: #{_beta_channel_forward.1} parent=1 // pred_region
      %24 = dma.done [#allocation3], 18432
    $region13: #{_beta_channel_forward.1} parent=1 // pred_fallthru
      _
    %v25 = vld [vmem:[%s0] sm:$0xff]
    %v26 = vld [vmem:[%s0 + $0x8] sm:$0xff]
    %v27 = vmax.f32 %v25, 1.1754944e-38
    %v28 = vmax.f32 %v26, 1.1754944e-38
    %v29 = vmin.f32 %v27, 0.99999994
    %v30 = vmin.f32 %v28, 0.99999994
    %v31 = vlog2.pop %v29
    %v32 = vmul.f32 %v31, 0.6931472
    %v33 = vlog2.pop %v30
    %v34 = vmul.f32 %v33, 0.6931472
    %v35 = vsub.f32 0.0, %v29
    %v36 = vsub.f32 0.0, %v30
    %v37 = vadd.f32 %v35, 1.0
    %v38 = vlog2.pop %v37
    %v39 = vmul.f32 %v38, 0.6931472
    %v40 = vmul.f32 -0.5, %v35
    %v41 = vadd.f32 %v40, 1.0
    %v42 = vmul.f32 %v41, %v35
    %v43 = vand.u32 2147483647, %v35
    %vm44 = vcmp.lt.f32.partialorder %v43, 0.0004427343
    %v45 = vsel %vm44, %v42, %v39
    %v46 = vadd.f32 %v36, 1.0
    %v47 = vlog2.pop %v46
    %v48 = vmul.f32 %v47, 0.6931472
    %v49 = vmul.f32 -0.5, %v36
    %v50 = vadd.f32 %v49, 1.0
    %v51 = vmul.f32 %v50, %v36
    %v52 = vand.u32 2147483647, %v36
    %vm53 = vcmp.lt.f32.partialorder %v52, 0.0004427343
    %v54 = vsel %vm53, %v51, %v48
    %v55 = vmul.f32 %v32, 2.0
    %v56 = vmul.f32 %v34, 2.0
    %v57 = vmul.f32 %v45, 8.0
    %v58 = vmul.f32 %v54, 8.0
    %v59 = vadd.f32 %v55, %v57
    %v60 = vadd.f32 %v56, %v58
    %v61 = vsub.f32 %v59, -6.204558
    %v62 = vsub.f32 %v60, -6.204558
    %v63 = vmul.f32 %v61, 1.442695
    %v64 = vpow.pop %v63
    %v65 = vmul.f32 %v62, 1.442695
    %v66 = vpow.pop %v65
    %v67 = vmul.f32 %v32, 10.0
    %v68 = vmul.f32 %v34, 10.0
    %v69 = vmul.f32 %v45, 10.0
    %v70 = vmul.f32 %v54, 10.0
    %v71 = vadd.f32 %v67, %v69
    %v72 = vadd.f32 %v68, %v70
    %v73 = vsub.f32 %v71, -15.171313
    %v74 = vsub.f32 %v72, -15.171313
    %v75 = vmul.f32 %v73, 1.442695
    %v76 = vpow.pop %v75
    %v77 = vmul.f32 %v74, 1.442695
    %v78 = vpow.pop %v77
    %v79 = vmul.f32 %v32, 8.0
    %v80 = vmul.f32 %v34, 8.0
    %v81 = vmul.f32 %v45, 2.0
    %v82 = vmul.f32 %v54, 2.0
    %v83 = vadd.f32 %v79, %v81
    %v84 = vadd.f32 %v80, %v82
    %v85 = vsub.f32 %v83, -6.204558
    %v86 = vsub.f32 %v84, -6.204558
    %v87 = vmul.f32 %v85, 1.442695
    %v88 = vpow.pop %v87
    %v89 = vmul.f32 %v86, 1.442695
    %v90 = vpow.pop %v89
    %v91 = vld [vmem:[#allocation2] sm:$0xff]
    %v92 = vld [vmem:[#allocation2 + $0x8] sm:$0xff]
    %v93 = vld [vmem:[#allocation2 + $0x10] sm:$0xff]
    %v94 = vld [vmem:[#allocation2 + $0x18] sm:$0xff]
    %v95 = vld [vmem:[#allocation2 + $0x20] sm:$0xff]
    %v96 = vld [vmem:[#allocation2 + $0x28] sm:$0xff]
    %v97 = vld [vmem:[#allocation2 + $0x30] sm:$0xff]
    %v98 = vld [vmem:[#allocation2 + $0x38] sm:$0xff]
    %v99 = vld [vmem:[#allocation2 + $0x40] sm:$0xff]
    %v100 = vld [vmem:[#allocation2 + $0x48] sm:$0xff]
    %v101 = vld [vmem:[#allocation2 + $0x50] sm:$0xff]
    %v102 = vld [vmem:[#allocation2 + $0x58] sm:$0xff]
    %v103 = vld [vmem:[#allocation2 + $0x60] sm:$0xff]
    %v104 = vld [vmem:[#allocation2 + $0x68] sm:$0xff]
    %v105 = vld [vmem:[#allocation2 + $0x70] sm:$0xff]
    %v106 = vld [vmem:[#allocation2 + $0x78] sm:$0xff]
    %v107 = vld [vmem:[#allocation2 + $0x80] sm:$0xff]
    %v108 = vld [vmem:[#allocation2 + $0x88] sm:$0xff]
    %v109 = vld [vmem:[#allocation2 + $0x90] sm:$0xff]
    %v110 = vld [vmem:[#allocation2 + $0x98] sm:$0xff]
    %v111 = vld [vmem:[#allocation2 + $0xa0] sm:$0xff]
    %v112 = vld [vmem:[#allocation2 + $0xa8] sm:$0xff]
    %v113 = vld [vmem:[#allocation2 + $0xb0] sm:$0xff]
    %v114 = vld [vmem:[#allocation2 + $0xb8] sm:$0xff]
    %v115 = vld [vmem:[#allocation2 + $0xc0] sm:$0xff]
    %v116 = vld [vmem:[#allocation2 + $0xc8] sm:$0xff]
    %v117 = vld [vmem:[#allocation2 + $0xd0] sm:$0xff]
    %v118 = vld [vmem:[#allocation2 + $0xd8] sm:$0xff]
    %v119 = vld [vmem:[#allocation2 + $0xe0] sm:$0xff]
    %v120 = vld [vmem:[#allocation2 + $0xe8] sm:$0xff]
    %v121 = vld [vmem:[#allocation2 + $0xf0] sm:$0xff]
    %v122 = vld [vmem:[#allocation2 + $0xf8] sm:$0xff]
    %v123 = vld [vmem:[#allocation2 + $0x100] sm:$0xff]
    %v124 = vld [vmem:[#allocation2 + $0x108] sm:$0xff]
    %v125 = vld [vmem:[#allocation2 + $0x110] sm:$0xff]
    %v126 = vld [vmem:[#allocation2 + $0x118] sm:$0xff]
    %v127 = vld [vmem:[#allocation2 + $0x120] sm:$0xff]
    %v128 = vld [vmem:[#allocation2 + $0x128] sm:$0xff]
    %v129 = vld [vmem:[#allocation2 + $0x130] sm:$0xff]
    %v130 = vld [vmem:[#allocation2 + $0x138] sm:$0xff]
    %v131 = vld [vmem:[#allocation2 + $0x140] sm:$0xff]
    %v132 = vld [vmem:[#allocation2 + $0x148] sm:$0xff]
    %v133 = vld [vmem:[#allocation2 + $0x150] sm:$0xff]
    %v134 = vld [vmem:[#allocation2 + $0x158] sm:$0xff]
    %v135 = vld [vmem:[#allocation2 + $0x160] sm:$0xff]
    %v136 = vld [vmem:[#allocation2 + $0x168] sm:$0xff]
    %v137 = vld [vmem:[#allocation2 + $0x170] sm:$0xff]
    %v138 = vld [vmem:[#allocation2 + $0x178] sm:$0xff]
    %v139 = vld [vmem:[#allocation2 + $0x180] sm:$0xff]
    %v140 = vld [vmem:[#allocation2 + $0x188] sm:$0xff]
    %v141 = vld [vmem:[#allocation2 + $0x190] sm:$0xff]
    %v142 = vld [vmem:[#allocation2 + $0x198] sm:$0xff]
    %v143 = vld [vmem:[#allocation2 + $0x1a0] sm:$0xff]
    %v144 = vld [vmem:[#allocation2 + $0x1a8] sm:$0xff]
    %v145 = vld [vmem:[#allocation2 + $0x1b0] sm:$0xff]
    %v146 = vld [vmem:[#allocation2 + $0x1b8] sm:$0xff]
    %v147 = vld [vmem:[#allocation2 + $0x1c0] sm:$0xff]
    %v148 = vld [vmem:[#allocation2 + $0x1c8] sm:$0xff]
    %v149 = vld [vmem:[#allocation2 + $0x1d0] sm:$0xff]
    %v150 = vld [vmem:[#allocation2 + $0x1d8] sm:$0xff]
    %v151 = vld [vmem:[#allocation2 + $0x1e0] sm:$0xff]
    %v152 = vld [vmem:[#allocation2 + $0x1e8] sm:$0xff]
    %v153 = vld [vmem:[#allocation2 + $0x1f0] sm:$0xff]
    %v154 = vld [vmem:[#allocation2 + $0x1f8] sm:$0xff]
    %v155 = vld [vmem:[#allocation2 + $0x200] sm:$0xff]
    %v156 = vld [vmem:[#allocation2 + $0x208] sm:$0xff]
    %v157 = vld [vmem:[#allocation2 + $0x210] sm:$0xff]
    %v158 = vld [vmem:[#allocation2 + $0x218] sm:$0xff]
    %v159 = vld [vmem:[#allocation2 + $0x220] sm:$0xff]
    %v160 = vld [vmem:[#allocation2 + $0x228] sm:$0xff]
    %v161 = vld [vmem:[#allocation2 + $0x230] sm:$0xff]
    %v162 = vld [vmem:[#allocation2 + $0x238] sm:$0xff]
    %v163 = vld [vmem:[#allocation2 + $0x240] sm:$0xff]
    %v164 = vld [vmem:[#allocation2 + $0x248] sm:$0xff]
    %v165 = vld [vmem:[#allocation2 + $0x250] sm:$0xff]
    %v166 = vld [vmem:[#allocation2 + $0x258] sm:$0xff]
    %v167 = vld [vmem:[#allocation2 + $0x260] sm:$0xff]
    %v168 = vld [vmem:[#allocation2 + $0x268] sm:$0xff]
    %v169 = vld [vmem:[#allocation2 + $0x270] sm:$0xff]
    %v170 = vld [vmem:[#allocation2 + $0x278] sm:$0xff]
    %v171 = vld [vmem:[#allocation2 + $0x280] sm:$0xff]
    %v172 = vld [vmem:[#allocation2 + $0x288] sm:$0xff]
    %v173 = vld [vmem:[#allocation2 + $0x290] sm:$0xff]
    %v174 = vld [vmem:[#allocation2 + $0x298] sm:$0xff]
    %v175 = vld [vmem:[#allocation2 + $0x2a0] sm:$0xff]
    %v176 = vld [vmem:[#allocation2 + $0x2a8] sm:$0xff]
    %v177 = vld [vmem:[#allocation2 + $0x2b0] sm:$0xff]
    %v178 = vld [vmem:[#allocation2 + $0x2b8] sm:$0xff]
    %v179 = vld [vmem:[#allocation2 + $0x2c0] sm:$0xff]
    %v180 = vld [vmem:[#allocation2 + $0x2c8] sm:$0xff]
    %v181 = vld [vmem:[#allocation2 + $0x2d0] sm:$0xff]
    %v182 = vld [vmem:[#allocation2 + $0x2d8] sm:$0xff]
    %v183 = vld [vmem:[#allocation2 + $0x2e0] sm:$0xff]
    %v184 = vld [vmem:[#allocation2 + $0x2e8] sm:$0xff]
    %v185 = vld [vmem:[#allocation2 + $0x2f0] sm:$0xff]
    %v186 = vld [vmem:[#allocation2 + $0x2f8] sm:$0xff]
    %v187 = vld [vmem:[#allocation2 + $0x300] sm:$0xff]
    %v188 = vld [vmem:[#allocation2 + $0x308] sm:$0xff]
    %v189 = vld [vmem:[#allocation2 + $0x310] sm:$0xff]
    %v190 = vld [vmem:[#allocation2 + $0x318] sm:$0xff]
    %v191 = vld [vmem:[#allocation2 + $0x320] sm:$0xff]
    %v192 = vld [vmem:[#allocation2 + $0x328] sm:$0xff]
    %v193 = vld [vmem:[#allocation2 + $0x330] sm:$0xff]
    %v194 = vld [vmem:[#allocation2 + $0x338] sm:$0xff]
    %v195 = vld [vmem:[#allocation2 + $0x340] sm:$0xff]
    %v196 = vld [vmem:[#allocation2 + $0x348] sm:$0xff]
    %v197 = vld [vmem:[#allocation2 + $0x350] sm:$0xff]
    %v198 = vld [vmem:[#allocation2 + $0x358] sm:$0xff]
    %v199 = vld [vmem:[#allocation2 + $0x360] sm:$0xff]
    %v200 = vld [vmem:[#allocation2 + $0x368] sm:$0xff]
    %v201 = vld [vmem:[#allocation2 + $0x370] sm:$0xff]
    %v202 = vld [vmem:[#allocation2 + $0x378] sm:$0xff]
    %v203 = vld [vmem:[#allocation2 + $0x380] sm:$0xff]
    %v204 = vld [vmem:[#allocation2 + $0x388] sm:$0xff]
    %v205 = vld [vmem:[#allocation2 + $0x390] sm:$0xff]
    %v206 = vld [vmem:[#allocation2 + $0x398] sm:$0xff]
    %v207 = vld [vmem:[#allocation2 + $0x3a0] sm:$0xff]
    %v208 = vld [vmem:[#allocation2 + $0x3a8] sm:$0xff]
    %v209 = vld [vmem:[#allocation2 + $0x3b0] sm:$0xff]
    %v210 = vld [vmem:[#allocation2 + $0x3b8] sm:$0xff]
    %v211 = vld [vmem:[#allocation2 + $0x3c0] sm:$0xff]
    %v212 = vld [vmem:[#allocation2 + $0x3c8] sm:$0xff]
    %v213 = vld [vmem:[#allocation2 + $0x3d0] sm:$0xff]
    %v214 = vld [vmem:[#allocation2 + $0x3d8] sm:$0xff]
    %v215 = vld [vmem:[#allocation2 + $0x3e0] sm:$0xff]
    %v216 = vld [vmem:[#allocation2 + $0x3e8] sm:$0xff]
    %v217 = vld [vmem:[#allocation2 + $0x3f0] sm:$0xff]
    %v218 = vld [vmem:[#allocation2 + $0x3f8] sm:$0xff]
    %v219 = vld [vmem:[#allocation2 + $0x400] sm:$0xff]
    %v220 = vld [vmem:[#allocation2 + $0x408] sm:$0xff]
    %v221 = vld [vmem:[#allocation2 + $0x410] sm:$0xff]
    %v222 = vld [vmem:[#allocation2 + $0x418] sm:$0xff]
    %v223 = vld [vmem:[#allocation2 + $0x420] sm:$0xff]
    %v224 = vld [vmem:[#allocation2 + $0x428] sm:$0xff]
    %v225 = vld [vmem:[#allocation2 + $0x430] sm:$0xff]
    %v226 = vld [vmem:[#allocation2 + $0x438] sm:$0xff]
    %v227 = vld [vmem:[#allocation2 + $0x440] sm:$0xff]
    %v228 = vld [vmem:[#allocation2 + $0x448] sm:$0xff]
    %v229 = vld [vmem:[#allocation2 + $0x450] sm:$0xff]
    %v230 = vld [vmem:[#allocation2 + $0x458] sm:$0xff]
    %v231 = vld [vmem:[#allocation2 + $0x460] sm:$0xff]
    %v232 = vld [vmem:[#allocation2 + $0x468] sm:$0xff]
    %v233 = vld [vmem:[#allocation2 + $0x470] sm:$0xff]
    %v234 = vld [vmem:[#allocation2 + $0x478] sm:$0xff]
    %235 = vmatprep.subr.mxu0 %v92
    %236 = vmatpush1.msra.mxu0 %v91
    %237 = vmatprep.subr.mxu0 %v95
    %238 = vmatpush1.msra.mxu0 %v94
    %239 = vmatprep.subr.mxu0 %v98
    %240 = vmatpush1.msra.mxu0 %v97
    %241 = vmatprep.subr.mxu0 %v101
    %242 = vmatpush1.msra.mxu0 %v100
    %243 = vmatprep.subr.mxu0 %v104
    %244 = vmatpush1.msra.mxu0 %v103
    %245 = vmatprep.subr.mxu0 %v107
    %246 = vmatpush1.msra.mxu0 %v106
    %247 = vmatprep.subr.mxu0 %v110
    %248 = vmatpush1.msra.mxu0 %v109
    %249 = vmatprep.subr.mxu0 %v113
    %250 = vmatpush1.msra.mxu0 %v112
    %251 = vmatprep.subr.mxu0 %v116
    %252 = vmatpush1.msra.mxu0 %v115
    %253 = vmatprep.subr.mxu0 %v119
    %254 = vmatpush1.msra.mxu0 %v118
    %255 = vmatprep.subr.mxu0 %v122
    %256 = vmatpush1.msra.mxu0 %v121
    %257 = vmatprep.subr.mxu0 %v125
    %258 = vmatpush1.msra.mxu0 %v124
    %259 = vmatprep.subr.mxu0 %v128
    %260 = vmatpush1.msra.mxu0 %v127
    %261 = vmatprep.subr.mxu0 %v131
    %262 = vmatpush1.msra.mxu0 %v130
    %263 = vmatprep.subr.mxu0 %v134
    %264 = vmatpush1.msra.mxu0 %v133
    %265 = vmatprep.subr.mxu0 %v137
    %266 = vmatpush1.msra.mxu0 %v136
    %267 = vmatprep.subr.mxu0 %v140
    %268 = vmatpush1.msra.mxu0 %v139
    %269 = vmatprep.subr.mxu0 %v143
    %270 = vmatpush1.msra.mxu0 %v142
    %271 = vmatprep.subr.mxu0 %v146
    %272 = vmatpush1.msra.mxu0 %v145
    %273 = vmatprep.subr.mxu0 %v149
    %274 = vmatpush1.msra.mxu0 %v148
    %275 = vmatprep.subr.mxu0 %v152
    %276 = vmatpush1.msra.mxu0 %v151
    %277 = vmatprep.subr.mxu0 %v155
    %278 = vmatpush1.msra.mxu0 %v154
    %279 = vmatprep.subr.mxu0 %v158
    %280 = vmatpush1.msra.mxu0 %v157
    %281 = vmatprep.subr.mxu0 %v161
    %282 = vmatpush1.msra.mxu0 %v160
    %283 = vmatprep.subr.mxu0 %v164
    %284 = vmatpush1.msra.mxu0 %v163
    %285 = vmatprep.subr.mxu0 %v167
    %286 = vmatpush1.msra.mxu0 %v166
    %287 = vmatprep.subr.mxu0 %v170
    %288 = vmatpush1.msra.mxu0 %v169
    %289 = vmatprep.subr.mxu0 %v173
    %290 = vmatpush1.msra.mxu0 %v172
    %291 = vmatprep.subr.mxu0 %v176
    %292 = vmatpush1.msra.mxu0 %v175
    %293 = vmatprep.subr.mxu0 %v179
    %294 = vmatpush1.msra.mxu0 %v178
    %295 = vmatprep.subr.mxu0 %v182
    %296 = vmatpush1.msra.mxu0 %v181
    %297 = vmatprep.subr.mxu0 %v185
    %298 = vmatpush1.msra.mxu0 %v184
    %299 = vmatprep.mubr.f32.mxu0 %v76
    %300 = vmatmul.mubr.f32.gmra.mrb[0].mxu0 %v64
    %v301 = vpop.f32.mrb[0].mxu0
    %v302 = vadd.f32 0.0, %v301
    %v303 = vpop.f32.mrb[0].mxu0
    %v304 = vadd.f32 0.0, %v303
    %305 = vmatprep.mubr.f32.mxu0 %v78
    %306 = vmatmul.mubr.f32.gmra.mrb[0].mxu0 %v66
    %v307 = vpop.f32.mrb[0].mxu0
    %v308 = vadd.f32 0.0, %v307
    %v309 = vpop.f32.mrb[0].mxu0
    %v310 = vadd.f32 0.0, %v309
    %311 = vdwg.mxu0
    %312 = vmatprep.subr.mxu0 %v188
    %313 = vmatpush1.msra.mxu0 %v187
    %314 = vmatprep.subr.mxu0 %v191
    %315 = vmatpush1.msra.mxu0 %v190
    %316 = vmatprep.subr.mxu0 %v194
    %317 = vmatpush1.msra.mxu0 %v193
    %318 = vmatprep.subr.mxu0 %v197
    %319 = vmatpush1.msra.mxu0 %v196
    %320 = vmatprep.subr.mxu0 %v200
    %321 = vmatpush1.msra.mxu0 %v199
    %322 = vmatprep.subr.mxu0 %v203
    %323 = vmatpush1.msra.mxu0 %v202
    %324 = vmatprep.subr.mxu0 %v206
    %325 = vmatpush1.msra.mxu0 %v205
    %326 = vmatprep.subr.mxu0 %v209
    %327 = vmatpush1.msra.mxu0 %v208
    %328 = vmatprep.subr.mxu0 %v212
    %329 = vmatpush1.msra.mxu0 %v211
    %330 = vmatprep.subr.mxu0 %v215
    %331 = vmatpush1.msra.mxu0 %v214
    %332 = vmatprep.subr.mxu0 %v218
    %333 = vmatpush1.msra.mxu0 %v217
    %334 = vmatprep.subr.mxu0 %v221
    %335 = vmatpush1.msra.mxu0 %v220
    %336 = vmatprep.subr.mxu0 %v224
    %337 = vmatpush1.msra.mxu0 %v223
    %338 = vmatprep.subr.mxu0 %v227
    %339 = vmatpush1.msra.mxu0 %v226
    %340 = vmatprep.subr.mxu0 %v230
    %341 = vmatpush1.msra.mxu0 %v229
    %342 = vmatprep.subr.mxu0 %v233
    %343 = vmatpush1.msra.mxu0 %v232
    %344 = vmatprep.subr.mxu0 0.0
    %345 = vmatpush1.msra.mxu0 0.0
    %346 = vmatprep.subr.mxu0 0.0
    %347 = vmatpush1.msra.mxu0 0.0
    %348 = vmatprep.subr.mxu0 0.0
    %349 = vmatpush1.msra.mxu0 0.0
    %350 = vmatprep.subr.mxu0 0.0
    %351 = vmatpush1.msra.mxu0 0.0
    %352 = vmatprep.subr.mxu0 0.0
    %353 = vmatpush1.msra.mxu0 0.0
    %354 = vmatprep.subr.mxu0 0.0
    %355 = vmatpush1.msra.mxu0 0.0
    %356 = vmatprep.subr.mxu0 0.0
    %357 = vmatpush1.msra.mxu0 0.0
    %358 = vmatprep.subr.mxu0 0.0
    %359 = vmatpush1.msra.mxu0 0.0
    %360 = vmatprep.subr.mxu0 0.0
    %361 = vmatpush1.msra.mxu0 0.0
    %362 = vmatprep.subr.mxu0 0.0
    %363 = vmatpush1.msra.mxu0 0.0
    %364 = vmatprep.subr.mxu0 0.0
    %365 = vmatpush1.msra.mxu0 0.0
    %366 = vmatprep.subr.mxu0 0.0
    %367 = vmatpush1.msra.mxu0 0.0
    %368 = vmatprep.subr.mxu0 0.0
    %369 = vmatpush1.msra.mxu0 0.0
    %370 = vmatprep.subr.mxu0 0.0
    %371 = vmatpush1.msra.mxu0 0.0
    %372 = vmatprep.subr.mxu0 0.0
    %373 = vmatpush1.msra.mxu0 0.0
    %374 = vmatprep.subr.mxu0 0.0
    %375 = vmatpush1.msra.mxu0 0.0
    %376 = vmatprep.mubr.f32.mxu0 0.0
    %377 = vmatmul.mubr.f32.gmra.mrb[0].mxu0 %v88
    %v378 = vpop.f32.mrb[0].mxu0
    %v379 = vadd.f32 %v302, %v378
    %v380 = vpop.f32.mrb[0].mxu0
    %v381 = vadd.f32 %v304, %v380
    %382 = vmatprep.mubr.f32.mxu0 0.0
    %383 = vmatmul.mubr.f32.gmra.mrb[0].mxu0 %v90
    %v384 = vpop.f32.mrb[0].mxu0
    %v385 = vadd.f32 %v308, %v384
    %v386 = vpop.f32.mrb[0].mxu0
    %v387 = vadd.f32 %v310, %v386
    %388 = vdwg.mxu0
    %389 = vmatprep.subr.mxu0 0.0
    %390 = vmatpush1.msra.mxu0 %v93
    %391 = vmatprep.subr.mxu0 0.0
    %392 = vmatpush1.msra.mxu0 %v96
    %393 = vmatprep.subr.mxu0 0.0
    %394 = vmatpush1.msra.mxu0 %v99
    %395 = vmatprep.subr.mxu0 0.0
    %396 = vmatpush1.msra.mxu0 %v102
    %397 = vmatprep.subr.mxu0 0.0
    %398 = vmatpush1.msra.mxu0 %v105
    %399 = vmatprep.subr.mxu0 0.0
    %400 = vmatpush1.msra.mxu0 %v108
    %401 = vmatprep.subr.mxu0 0.0
    %402 = vmatpush1.msra.mxu0 %v111
    %403 = vmatprep.subr.mxu0 0.0
    %404 = vmatpush1.msra.mxu0 %v114
    %405 = vmatprep.subr.mxu0 0.0
    %406 = vmatpush1.msra.mxu0 %v117
    %407 = vmatprep.subr.mxu0 0.0
    %408 = vmatpush1.msra.mxu0 %v120
    %409 = vmatprep.subr.mxu0 0.0
    %410 = vmatpush1.msra.mxu0 %v123
    %411 = vmatprep.subr.mxu0 0.0
    %412 = vmatpush1.msra.mxu0 %v126
    %413 = vmatprep.subr.mxu0 0.0
    %414 = vmatpush1.msra.mxu0 %v129
    %415 = vmatprep.subr.mxu0 0.0
    %416 = vmatpush1.msra.mxu0 %v132
    %417 = vmatprep.subr.mxu0 0.0
    %418 = vmatpush1.msra.mxu0 %v135
    %419 = vmatprep.subr.mxu0 0.0
    %420 = vmatpush1.msra.mxu0 %v138
    %421 = vmatprep.subr.mxu0 0.0
    %422 = vmatpush1.msra.mxu0 %v141
    %423 = vmatprep.subr.mxu0 0.0
    %424 = vmatpush1.msra.mxu0 %v144
    %425 = vmatprep.subr.mxu0 0.0
    %426 = vmatpush1.msra.mxu0 %v147
    %427 = vmatprep.subr.mxu0 0.0
    %428 = vmatpush1.msra.mxu0 %v150
    %429 = vmatprep.subr.mxu0 0.0
    %430 = vmatpush1.msra.mxu0 %v153
    %431 = vmatprep.subr.mxu0 0.0
    %432 = vmatpush1.msra.mxu0 %v156
    %433 = vmatprep.subr.mxu0 0.0
    %434 = vmatpush1.msra.mxu0 %v159
    %435 = vmatprep.subr.mxu0 0.0
    %436 = vmatpush1.msra.mxu0 %v162
    %437 = vmatprep.subr.mxu0 0.0
    %438 = vmatpush1.msra.mxu0 %v165
    %439 = vmatprep.subr.mxu0 0.0
    %440 = vmatpush1.msra.mxu0 %v168
    %441 = vmatprep.subr.mxu0 0.0
    %442 = vmatpush1.msra.mxu0 %v171
    %443 = vmatprep.subr.mxu0 0.0
    %444 = vmatpush1.msra.mxu0 %v174
    %445 = vmatprep.subr.mxu0 0.0
    %446 = vmatpush1.msra.mxu0 %v177
    %447 = vmatprep.subr.mxu0 0.0
    %448 = vmatpush1.msra.mxu0 %v180
    %449 = vmatprep.subr.mxu0 0.0
    %450 = vmatpush1.msra.mxu0 %v183
    %451 = vmatprep.subr.mxu0 0.0
    %452 = vmatpush1.msra.mxu0 %v186
    %453 = vmatprep.mubr.f32.mxu0 %v76
    %454 = vmatmul.mubr.f32.gmra.mrb[0].mxu0 %v64
    %v455 = vpop.f32.mrb[0].mxu0
    %v456 = vadd.f32 0.0, %v455
    %v457 = vpop.f32.mrb[0].mxu0
    %458 = vmatprep.mubr.f32.mxu0 %v78
    %459 = vmatmul.mubr.f32.gmra.mrb[0].mxu0 %v66
    %v460 = vpop.f32.mrb[0].mxu0
    %v461 = vadd.f32 0.0, %v460
    %v462 = vpop.f32.mrb[0].mxu0
    %463 = vdwg.mxu0
    %464 = vmatprep.subr.mxu0 0.0
    %465 = vmatpush1.msra.mxu0 %v189
    %466 = vmatprep.subr.mxu0 0.0
    %467 = vmatpush1.msra.mxu0 %v192
    %468 = vmatprep.subr.mxu0 0.0
    %469 = vmatpush1.msra.mxu0 %v195
    %470 = vmatprep.subr.mxu0 0.0
    %471 = vmatpush1.msra.mxu0 %v198
    %472 = vmatprep.subr.mxu0 0.0
    %473 = vmatpush1.msra.mxu0 %v201
    %474 = vmatprep.subr.mxu0 0.0
    %475 = vmatpush1.msra.mxu0 %v204
    %476 = vmatprep.subr.mxu0 0.0
    %477 = vmatpush1.msra.mxu0 %v207
    %478 = vmatprep.subr.mxu0 0.0
    %479 = vmatpush1.msra.mxu0 %v210
    %480 = vmatprep.subr.mxu0 0.0
    %481 = vmatpush1.msra.mxu0 %v213
    %482 = vmatprep.subr.mxu0 0.0
    %483 = vmatpush1.msra.mxu0 %v216
    %484 = vmatprep.subr.mxu0 0.0
    %485 = vmatpush1.msra.mxu0 %v219
    %486 = vmatprep.subr.mxu0 0.0
    %487 = vmatpush1.msra.mxu0 %v222
    %488 = vmatprep.subr.mxu0 0.0
    %489 = vmatpush1.msra.mxu0 %v225
    %490 = vmatprep.subr.mxu0 0.0
    %491 = vmatpush1.msra.mxu0 %v228
    %492 = vmatprep.subr.mxu0 0.0
    %493 = vmatpush1.msra.mxu0 %v231
    %494 = vmatprep.subr.mxu0 0.0
    %495 = vmatpush1.msra.mxu0 %v234
    %496 = vmatprep.subr.mxu0 0.0
    %497 = vmatpush1.msra.mxu0 0.0
    %498 = vmatprep.subr.mxu0 0.0
    %499 = vmatpush1.msra.mxu0 0.0
    %500 = vmatprep.subr.mxu0 0.0
    %501 = vmatpush1.msra.mxu0 0.0
    %502 = vmatprep.subr.mxu0 0.0
    %503 = vmatpush1.msra.mxu0 0.0
    %504 = vmatprep.subr.mxu0 0.0
    %505 = vmatpush1.msra.mxu0 0.0
    %506 = vmatprep.subr.mxu0 0.0
    %507 = vmatpush1.msra.mxu0 0.0
    %508 = vmatprep.subr.mxu0 0.0
    %509 = vmatpush1.msra.mxu0 0.0
    %510 = vmatprep.subr.mxu0 0.0
    %511 = vmatpush1.msra.mxu0 0.0
    %512 = vmatprep.subr.mxu0 0.0
    %513 = vmatpush1.msra.mxu0 0.0
    %514 = vmatprep.subr.mxu0 0.0
    %515 = vmatpush1.msra.mxu0 0.0
    %516 = vmatprep.subr.mxu0 0.0
    %517 = vmatpush1.msra.mxu0 0.0
    %518 = vmatprep.subr.mxu0 0.0
    %519 = vmatpush1.msra.mxu0 0.0
    %520 = vmatprep.subr.mxu0 0.0
    %521 = vmatpush1.msra.mxu0 0.0
    %522 = vmatprep.subr.mxu0 0.0
    %523 = vmatpush1.msra.mxu0 0.0
    %524 = vmatprep.subr.mxu0 0.0
    %525 = vmatpush1.msra.mxu0 0.0
    %526 = vmatprep.subr.mxu0 0.0
    %527 = vmatpush1.msra.mxu0 0.0
    %528 = vmatprep.mubr.f32.mxu0 0.0
    %529 = vmatmul.mubr.f32.gmra.mrb[0].mxu0 %v88
    %v530 = vpop.f32.mrb[0].mxu0
    %v531 = vadd.f32 %v456, %v530
    %v532 = vpop.f32.mrb[0].mxu0
    %533 = vmatprep.mubr.f32.mxu0 0.0
    %534 = vmatmul.mubr.f32.gmra.mrb[0].mxu0 %v90
    %v535 = vpop.f32.mrb[0].mxu0
    %v536 = vadd.f32 %v461, %v535
    %v537 = vpop.f32.mrb[0].mxu0
    %538 = vdwg.mxu0
    %539 = vst [vmem:[%s2] sm:$0xff] %v379
    %540 = vst [vmem:[%s2 + $0x8] sm:$0xff] %v381
    %541 = vst [vmem:[%s2 + $0x10] sm:$0xff] %v531
    %542 = vst [vmem:[%s2 + $0x18] sm:$0xff] %v385
    %543 = vst [vmem:[%s2 + $0x20] sm:$0xff] %v387
    %544 = vst [vmem:[%s2 + $0x28] sm:$0xff] %v536
    // Predicated region
    $region14: #{_beta_channel_forward.1} parent=1 // pred_check
      _
    $region15: #{_beta_channel_forward.1} parent=1 // pred_check_branch
      %546 = sbr.rel (0) target = $region17
    $region16: #{_beta_channel_forward.1} parent=1 // pred_region
      _
    $region17: #{_beta_channel_forward.1} parent=1 // pred_fallthru
      _
    // Predicated region
    $region18: #{_beta_channel_forward.1} parent=1 // pred_check
      _
    $region19: #{_beta_channel_forward.1} parent=1 // pred_check_branch
      %548 = sbr.rel (0) target = $region21
    $region20: #{_beta_channel_forward.1} parent=1 // pred_region
      _
    $region21: #{_beta_channel_forward.1} parent=1 // pred_fallthru
      _
    %549 = vsyncpa [#allocation3], 1

</llo_original>
